<compile_context>
chip_gen: v7x
topology: tpu7x:2x2x1
jax: 0.10.0
libtpu: 0.0.40
codegen_flags: <defaults>
</compile_context>

<pallas_src>
import jax
import jax.numpy as jnp
from jax.experimental import pallas as pl
from jax.experimental.pallas import tpu as pltpu

EMB_DIM = 2     # embedding_net output dim (siamese-triplet contract)
LANE = 128      # TPU lane width; embedding head padded to lane-dense width
TB = 8          # batch tile (multiple of the f32 sublane tile of 8)


def embedding_kernel(a_ref, x_ref, w1_ref, b1_ref, w2_ref, b2_ref, out_ref):
    """One batch tile of the embedding net: Linear(D,H) -> PReLU -> Linear(H, LANE)."""
    x = x_ref[...]                                                     # [TB, D] f32
    h = jnp.dot(x, w1_ref[...], preferred_element_type=jnp.float32) + b1_ref[...]
    a = a_ref[0]                                                       # PReLU scalar (SMEM)
    h = jnp.where(h > 0, h, a * h)
    # w2/b2 are zero-padded to 128 output lanes in the wrapper -> lane-dense store.
    out_ref[...] = (jnp.dot(h, w2_ref[...], preferred_element_type=jnp.float32)
                    + b2_ref[...])


def embedding_forward(x, params):
    """Gridded Pallas forward of the synthesized embedding net on a [B, D] batch."""
    B, D = x.shape
    H = params["w1"].shape[1]

    # Pad batch up to a multiple of the batch tile.
    Bp = ((B + TB - 1) // TB) * TB
    if Bp != B:
        x = jnp.pad(x, ((0, Bp - B), (0, 0)))

    # Lane-dense output head: pad the 2-wide projection to 128 columns with zeros.
    w2p = jnp.pad(params["w2"], ((0, 0), (0, LANE - EMB_DIM)))
    b2p = jnp.pad(params["b2"], ((0, 0), (0, LANE - EMB_DIM)))

    grid = (Bp // TB,)
    flops = 2 * Bp * (D * H + H * LANE)
    bytes_accessed = 4 * (Bp * D + D * H + H + H * LANE + LANE + Bp * LANE + 1)

    out = pl.pallas_call(
        embedding_kernel,
        out_shape=jax.ShapeDtypeStruct((Bp, LANE), jnp.float32),
        grid_spec=pltpu.PrefetchScalarGridSpec(
            num_scalar_prefetch=0,
            grid=grid,
            in_specs=[
                pl.BlockSpec(memory_space=pltpu.MemorySpace.SMEM),   # PReLU scalar (1,)
                pl.BlockSpec((TB, D), lambda i: (i, 0)),             # x batch tile
                pl.BlockSpec((D, H), lambda i: (0, 0)),              # w1 (resident)
                pl.BlockSpec((1, H), lambda i: (0, 0)),              # b1 (resident)
                pl.BlockSpec((H, LANE), lambda i: (0, 0)),           # w2 padded (resident)
                pl.BlockSpec((1, LANE), lambda i: (0, 0)),           # b2 padded (resident)
            ],
            out_specs=pl.BlockSpec((TB, LANE), lambda i: (i, 0)),
        ),
        compiler_params=pltpu.CompilerParams(
            dimension_semantics=("parallel",),
            vmem_limit_bytes=32 * 1024 * 1024,
        ),
        cost_estimate=pl.CostEstimate(
            flops=flops, transcendentals=0, bytes_accessed=bytes_accessed),
    )(params["a"], x, params["w1"], params["b1"], w2p, b2p)

    return out[:B, :EMB_DIM]


def siamese_net_forward(x1, x2, params):
    """SiameseNet.forward: (embedding_net(x1), embedding_net(x2)) in one launch."""
    B = x1.shape[0]
    x = jnp.concatenate([x1, x2], axis=0)   # one batch grid covers both branches
    emb = embedding_forward(x, params)
    return emb[:B], emb[B:]


def init_params(key, d_in, hidden):
    k1, k2, k3, k4 = jax.random.split(key, 4)
    s1 = 1.0 / jnp.sqrt(d_in)
    s2 = 1.0 / jnp.sqrt(hidden)
    return {
        "w1": jax.random.uniform(k1, (d_in, hidden), jnp.float32, -s1, s1),
        "b1": jax.random.uniform(k2, (1, hidden), jnp.float32, -s1, s1),
        "w2": jax.random.uniform(k3, (hidden, EMB_DIM), jnp.float32, -s2, s2),
        "b2": jax.random.uniform(k4, (1, EMB_DIM), jnp.float32, -s2, s2),
        "a": jnp.full((1,), 0.25, jnp.float32),   # nn.PReLU default (single shared weight)
    }


def reference_embedding(x, p):
    h = x @ p["w1"] + p["b1"]
    h = jnp.where(h > 0, h, p["a"][0] * h)
    return h @ p["w2"] + p["b2"]


def reference_siamese(x1, x2, p):
    return reference_embedding(x1, p), reference_embedding(x2, p)


if __name__ == "__main__":
    B, D, H = 8, 32, 64

    key = jax.random.PRNGKey(0)
    k1, k2, kp = jax.random.split(key, 3)
    x1 = jax.random.normal(k1, (B, D), jnp.float32)
    x2 = jax.random.normal(k2, (B, D), jnp.float32)
    params = init_params(kp, D, H)

    out1, out2 = siamese_net_forward(x1, x2, params)
    out1 = jax.block_until_ready(out1)
    out2 = jax.block_until_ready(out2)

    ref1, ref2 = reference_siamese(x1, x2, params)
    assert out1.shape == (B, EMB_DIM) and out2.shape == (B, EMB_DIM)
    assert jnp.allclose(out1, ref1, atol=1e-5, rtol=1e-5), "branch-1 mismatch vs reference"
    assert jnp.allclose(out2, ref2, atol=1e-5, rtol=1e-5), "branch-2 mismatch vs reference"

    print("KERNEL_OK")
</pallas_src>

<mosaic_0001>
module attributes {stable_mosaic.version = 11 : i64} {
  func.func @embedding_kernel(%arg0: i32, %arg1: memref<1xf32, #tpu.memory_space<smem>>, %arg2: memref<8x32xf32, #tpu.memory_space<vmem>>, %arg3: memref<32x64xf32, #tpu.memory_space<vmem>>, %arg4: memref<1x64xf32, #tpu.memory_space<vmem>>, %arg5: memref<64x128xf32, #tpu.memory_space<vmem>>, %arg6: memref<1x128xf32, #tpu.memory_space<vmem>>, %arg7: memref<8x128xf32, #tpu.memory_space<vmem>>) attributes {dimension_semantics = [#tpu.dimension_semantics<parallel>], iteration_bounds = array<i64: 2>, scalar_prefetch = 0 : i64, scratch_operands = 0 : i64, tpu.core_type = #tpu.core_type<tc>, window_params = [{transform_indices = @transform_0, window_bounds = array<i64: 1>}, {transform_indices = @transform_1, window_bounds = array<i64: 8, 32>}, {pipeline_mode = #tpu.pipeline_mode<synchronous>, transform_indices = @transform_2, window_bounds = array<i64: 32, 64>}, {pipeline_mode = #tpu.pipeline_mode<synchronous>, transform_indices = @transform_3, window_bounds = array<i64: 1, 64>}, {pipeline_mode = #tpu.pipeline_mode<synchronous>, transform_indices = @transform_4, window_bounds = array<i64: 64, 128>}, {pipeline_mode = #tpu.pipeline_mode<synchronous>, transform_indices = @transform_5, window_bounds = array<i64: 1, 128>}, {transform_indices = @transform_6, window_bounds = array<i64: 8, 128>}]} {
    %c0 = arith.constant 0 : index
    %c0_0 = arith.constant 0 : index
    %0 = vector.load %arg2[%c0, %c0_0] : memref<8x32xf32, #tpu.memory_space<vmem>>, vector<8x32xf32>
    %c0_1 = arith.constant 0 : index
    %c0_2 = arith.constant 0 : index
    %1 = vector.load %arg3[%c0_1, %c0_2] : memref<32x64xf32, #tpu.memory_space<vmem>>, vector<32x64xf32>
    %cst = arith.constant dense<0.000000e+00> : vector<8x64xf32>
    %2 = tpu.matmul %0, %1, %cst {dimension_numbers = #tpu.dot_dimension_numbers<[1], [0], [0], [1], [0, 0, 1, 1], [], []>} : vector<8x32xf32>, vector<32x64xf32>, vector<8x64xf32> -> vector<8x64xf32>
    %c0_3 = arith.constant 0 : index
    %c0_4 = arith.constant 0 : index
    %3 = vector.load %arg4[%c0_3, %c0_4] : memref<1x64xf32, #tpu.memory_space<vmem>>, vector<1x64xf32>
    %4 = vector.broadcast %3 : vector<1x64xf32> to vector<8x64xf32>
    %5 = arith.addf %2, %4 : vector<8x64xf32>
    %c0_5 = arith.constant 0 : index
    %6 = memref.load %arg1[%c0_5] : memref<1xf32, #tpu.memory_space<smem>>
    %cst_6 = arith.constant 0.000000e+00 : f32
    %7 = vector.broadcast %cst_6 : f32 to vector<8x64xf32>
    %8 = arith.cmpf ogt, %5, %7 : vector<8x64xf32>
    %9 = vector.broadcast %6 : f32 to vector<8x64xf32>
    %10 = arith.mulf %9, %5 : vector<8x64xf32>
    %11 = arith.select %8, %5, %10 : vector<8x64xi1>, vector<8x64xf32>
    %c0_7 = arith.constant 0 : index
    %c0_8 = arith.constant 0 : index
    %12 = vector.load %arg5[%c0_7, %c0_8] : memref<64x128xf32, #tpu.memory_space<vmem>>, vector<64x128xf32>
    %cst_9 = arith.constant dense<0.000000e+00> : vector<8x128xf32>
    %13 = tpu.matmul %11, %12, %cst_9 {dimension_numbers = #tpu.dot_dimension_numbers<[1], [0], [0], [1], [0, 0, 1, 1], [], []>} : vector<8x64xf32>, vector<64x128xf32>, vector<8x128xf32> -> vector<8x128xf32>
    %c0_10 = arith.constant 0 : index
    %c0_11 = arith.constant 0 : index
    %14 = vector.load %arg6[%c0_10, %c0_11] : memref<1x128xf32, #tpu.memory_space<vmem>>, vector<1x128xf32>
    %15 = vector.broadcast %14 : vector<1x128xf32> to vector<8x128xf32>
    %16 = arith.addf %13, %15 : vector<8x128xf32>
    %c0_12 = arith.constant 0 : index
    %c0_13 = arith.constant 0 : index
    %17 = vector.load %arg7[%c0_12, %c0_13] : memref<8x128xf32, #tpu.memory_space<vmem>>, vector<8x128xf32>
    tpu.vector_store %arg7[%c0_12, %c0_13], %16 {strides = array<i32>} : memref<8x128xf32, #tpu.memory_space<vmem>>, vector<8x128xf32>,
    return
  }
  func.func @transform_0(%arg0: i32) -> i32 {
    %c0_i32 = arith.constant 0 : i32
    %c0_i32_0 = arith.constant 0 : i32
    return %c0_i32 : i32
  }
  func.func @transform_1(%arg0: i32) -> (i32, i32) {
    %c0_i32 = arith.constant 0 : i32
    %c0_i32_0 = arith.constant 0 : i32
    return %arg0, %c0_i32 : i32, i32
  }
  func.func @transform_2(%arg0: i32) -> (i32, i32) {
    %c0_i32 = arith.constant 0 : i32
    %c0_i32_0 = arith.constant 0 : i32
    %c0_i32_1 = arith.constant 0 : i32
    return %c0_i32, %c0_i32_0 : i32, i32
  }
  func.func @transform_3(%arg0: i32) -> (i32, i32) {
    %c0_i32 = arith.constant 0 : i32
    %c0_i32_0 = arith.constant 0 : i32
    %c0_i32_1 = arith.constant 0 : i32
    return %c0_i32, %c0_i32_0 : i32, i32
  }
  func.func @transform_4(%arg0: i32) -> (i32, i32) {
    %c0_i32 = arith.constant 0 : i32
    %c0_i32_0 = arith.constant 0 : i32
    %c0_i32_1 = arith.constant 0 : i32
    return %c0_i32, %c0_i32_0 : i32, i32
  }
  func.func @transform_5(%arg0: i32) -> (i32, i32) {
    %c0_i32 = arith.constant 0 : i32
    %c0_i32_0 = arith.constant 0 : i32
    %c0_i32_1 = arith.constant 0 : i32
    return %c0_i32, %c0_i32_0 : i32, i32
  }
  func.func @transform_6(%arg0: i32) -> (i32, i32) {
    %c0_i32 = arith.constant 0 : i32
    %c0_i32_0 = arith.constant 0 : i32
    return %arg0, %c0_i32 : i32, i32
  }
}

</mosaic_0001>

<llo_original>
// kernel: tpu_custom_call.1
$region0: #{tpu_custom_call.1}
  #allocation0 [shape = 'u32[]', space=smem, size = 0x4, offset = 0x4, fixed_abs, tag = 'smem constant byte address 0x4 - core index']
  #allocation1 [shape = 'u32[144,128]{1,0:T(1,128)}', space=vmem, size = 0x12000, scoped, tag = 'internal scratch']
  #allocation2 [shape = 'f32[1]{0:T(128)S(6)}', space=smem, size = 0x200, scoped, tag = 'scoped memory for tpu_custom_call.1']
  %s0 = inlined_call_operand.<no memory space> [shape: f32[1], index: 0, kind: input, shape index: {}]
  %s1 = inlined_call_operand.hbm [shape: f32[16,32], index: 1, kind: input, shape index: {}]
  %s2 = inlined_call_operand.hbm [shape: f32[32,64], index: 2, kind: input, shape index: {}]
  %s3 = inlined_call_operand.vmem [shape: f32[1,64], index: 3, kind: input, shape index: {}]
  %s4 = inlined_call_operand.hbm [shape: f32[64,128], index: 4, kind: input, shape index: {}]
  %s5 = inlined_call_operand.vmem [shape: f32[1,128], index: 5, kind: input, shape index: {}]
  %s6 = inlined_call_operand.hbm [shape: f32[16,128], index: 6, kind: output, shape index: {}]
  %s7 = sld [smem:[#allocation0]]
  $region69: #{tpu_custom_call.1} parent=0
    _
  %s9 = ssub.s32 1, %s7
  %s10 = scalar_select 0, %s9, %s7
  %11 = sst [smem:[#allocation2]] %s0
  $region1: #{tpu_custom_call.1} parent=0
    #allocation3 [shape = 'u8[8192]{0}', space=vmem, size = 0x2000, scoped, tag = 'input window, operand 1']
    #allocation4 [shape = 's32[2]{0}', space=sflag, size = 0x8, scoped, tag = 'scoped memory for tpu_custom_call.1']
    #allocation5 [shape = 's32[2]{0}', space=sflag, size = 0x8, scoped, tag = 'scoped memory for tpu_custom_call.1']
    #allocation6 [shape = 'u8[16384]{0}', space=vmem, size = 0x4000, scoped, tag = 'input window, operand 2, single buffered']
    #allocation7 [shape = 's32[1]{0}', space=sflag, size = 0x4, scoped, tag = 'scoped memory for tpu_custom_call.1']
    #allocation8 [shape = 'u8[32768]{0}', space=vmem, size = 0x8000, scoped, tag = 'input window, operand 4, single buffered']
    #allocation9 [shape = 'u8[8192]{0}', space=vmem, size = 0x2000, scoped, tag = 'output window, operand 0']
    %12 = vsyncpa [#allocation4], 0
    %s13 = scalar_lea.sflag [#allocation4], 1
    %14 = vsyncpa %s13, 0
    %15 = vsyncpa [#allocation7], 0
    %16 = vsyncpa [#allocation5], 0
    %s17 = scalar_lea.sflag [#allocation5], 1
    %18 = vsyncpa %s17, 0
    loop: start=0, step=1, limit=4
    $region2: #{tpu_custom_call.1} parent=1 // loop_pre_header
      _
    $region3: #{tpu_custom_call.1} parent=1 // loop_header
      %s20 = sphi 0, %s24
      %p21 = scmp.ge.s32.totalorder %s20, 4
      %s28 = sphi 0, %s28
      %s30 = sphi 0, %s28
      %s31 = sphi 0, %s30
      %s45 = sphi 0, %s31
      %s51 = sphi 0, %s53
      %s54 = sphi 0, %s51
      %s55 = sphi 0, %s54
      %s71 = sphi 0, %s55
      %s75 = sphi 0, %s75
      %s77 = sphi 0, %s75
      %s78 = sphi 0, %s77
      %s92 = sphi 0, %s78
      %s96 = sphi 0, %s96
      %s98 = sphi 0, %s96
      %s99 = sphi 0, %s98
      %s113 = sphi 0, %s99
      %s117 = sphi 0, %s117
      %s119 = sphi 0, %s117
      %s120 = sphi 0, %s119
      %s134 = sphi 0, %s120
      %s138 = sphi 0, %s138
      %s140 = sphi 0, %s138
      %s141 = sphi 0, %s140
      %s155 = sphi 0, %s141
      %s161 = sphi 0, %s163
      %s164 = sphi 0, %s161
      %s165 = sphi 0, %s164
      %s181 = sphi 0, %s165
    $region4: #{tpu_custom_call.1} parent=1 // loop_header_branch
      %23 = sbr.rel (%p21) target = $region8
    $region5: #{tpu_custom_call.1} parent=1 // loop_body
      %s25 = ssub.s32 %s20, 1
      %s26 = ssub.s32 %s20, 2
      %s27 = sadd.s32 %s20, 1
      %s29 = sadd.s32 %s28, 1
      %p32 = scmp.eq.s32.totalorder %s20, 1
      %p33 = scmp.ne.s32.totalorder %s28, %s30
      %p34 = scmp.eq.s32.totalorder %s20, 0
      %p35 = por %p33, %p34
      %p36 = scmp.ne.s32.totalorder %s28, %s30
      %p37 = scmp.eq.s32.totalorder %s25, 1
      %p38 = por %p36, %p37
      %p39 = scmp.ne.s32.totalorder %s30, %s31
      %p40 = scmp.eq.s32.totalorder %s25, 0
      %p41 = por %p39, %p40
      %p42 = scmp.ne.s32.totalorder %s30, %s31
      %p43 = scmp.eq.s32.totalorder %s26, 1
      %p44 = por %p42, %p43
      %p46 = scmp.ne.s32.totalorder %s31, %s45
      %p47 = scmp.eq.s32.totalorder %s26, 0
      %p48 = por %p46, %p47
      %s49 = ssub.s32 %s20, %s27
      %p50 = scmp.eq.s32.totalorder %s49, 0
      %s52 = sadd.s32 %s51, 1
      %s53 = scalar_select %p50, %s51, %s52
      %p56 = pneg %p50
      %p57 = scmp.eq.s32.totalorder %s20, 1
      %p58 = por %p56, %p57
      %p59 = scmp.ne.s32.totalorder %s51, %s54
      %p60 = scmp.eq.s32.totalorder %s20, 0
      %p61 = por %p59, %p60
      %p62 = scmp.ne.s32.totalorder %s51, %s54
      %p63 = scmp.eq.s32.totalorder %s25, 1
      %p64 = por %p62, %p63
      %p65 = scmp.ne.s32.totalorder %s54, %s55
      %p66 = scmp.eq.s32.totalorder %s25, 0
      %p67 = por %p65, %p66
      %p68 = scmp.ne.s32.totalorder %s54, %s55
      %p69 = scmp.eq.s32.totalorder %s26, 1
      %p70 = por %p68, %p69
      %p72 = scmp.ne.s32.totalorder %s55, %s71
      %p73 = scmp.eq.s32.totalorder %s26, 0
      %p74 = por %p72, %p73
      %s76 = sadd.s32 %s75, 1
      %p79 = scmp.eq.s32.totalorder %s20, 1
      %p80 = scmp.ne.s32.totalorder %s75, %s77
      %p81 = scmp.eq.s32.totalorder %s20, 0
      %p82 = por %p80, %p81
      %p83 = scmp.ne.s32.totalorder %s75, %s77
      %p84 = scmp.eq.s32.totalorder %s25, 1
      %p85 = por %p83, %p84
      %p86 = scmp.ne.s32.totalorder %s77, %s78
      %p87 = scmp.eq.s32.totalorder %s25, 0
      %p88 = por %p86, %p87
      %p89 = scmp.ne.s32.totalorder %s77, %s78
      %p90 = scmp.eq.s32.totalorder %s26, 1
      %p91 = por %p89, %p90
      %p93 = scmp.ne.s32.totalorder %s78, %s92
      %p94 = scmp.eq.s32.totalorder %s26, 0
      %p95 = por %p93, %p94
      %s97 = sadd.s32 %s96, 1
      %p100 = scmp.eq.s32.totalorder %s20, 1
      %p101 = scmp.ne.s32.totalorder %s96, %s98
      %p102 = scmp.eq.s32.totalorder %s20, 0
      %p103 = por %p101, %p102
      %p104 = scmp.ne.s32.totalorder %s96, %s98
      %p105 = scmp.eq.s32.totalorder %s25, 1
      %p106 = por %p104, %p105
      %p107 = scmp.ne.s32.totalorder %s98, %s99
      %p108 = scmp.eq.s32.totalorder %s25, 0
      %p109 = por %p107, %p108
      %p110 = scmp.ne.s32.totalorder %s98, %s99
      %p111 = scmp.eq.s32.totalorder %s26, 1
      %p112 = por %p110, %p111
      %p114 = scmp.ne.s32.totalorder %s99, %s113
      %p115 = scmp.eq.s32.totalorder %s26, 0
      %p116 = por %p114, %p115
      %s118 = sadd.s32 %s117, 1
      %p121 = scmp.eq.s32.totalorder %s20, 1
      %p122 = scmp.ne.s32.totalorder %s117, %s119
      %p123 = scmp.eq.s32.totalorder %s20, 0
      %p124 = por %p122, %p123
      %p125 = scmp.ne.s32.totalorder %s117, %s119
      %p126 = scmp.eq.s32.totalorder %s25, 1
      %p127 = por %p125, %p126
      %p128 = scmp.ne.s32.totalorder %s119, %s120
      %p129 = scmp.eq.s32.totalorder %s25, 0
      %p130 = por %p128, %p129
      %p131 = scmp.ne.s32.totalorder %s119, %s120
      %p132 = scmp.eq.s32.totalorder %s26, 1
      %p133 = por %p131, %p132
      %p135 = scmp.ne.s32.totalorder %s120, %s134
      %p136 = scmp.eq.s32.totalorder %s26, 0
      %p137 = por %p135, %p136
      %s139 = sadd.s32 %s138, 1
      %p142 = scmp.eq.s32.totalorder %s20, 1
      %p143 = scmp.ne.s32.totalorder %s138, %s140
      %p144 = scmp.eq.s32.totalorder %s20, 0
      %p145 = por %p143, %p144
      %p146 = scmp.ne.s32.totalorder %s138, %s140
      %p147 = scmp.eq.s32.totalorder %s25, 1
      %p148 = por %p146, %p147
      %p149 = scmp.ne.s32.totalorder %s140, %s141
      %p150 = scmp.eq.s32.totalorder %s25, 0
      %p151 = por %p149, %p150
      %p152 = scmp.ne.s32.totalorder %s140, %s141
      %p153 = scmp.eq.s32.totalorder %s26, 1
      %p154 = por %p152, %p153
      %p156 = scmp.ne.s32.totalorder %s141, %s155
      %p157 = scmp.eq.s32.totalorder %s26, 0
      %p158 = por %p156, %p157
      %s159 = ssub.s32 %s20, %s27
      %p160 = scmp.eq.s32.totalorder %s159, 0
      %s162 = sadd.s32 %s161, 1
      %s163 = scalar_select %p160, %s161, %s162
      %p166 = pneg %p160
      %p167 = scmp.eq.s32.totalorder %s20, 1
      %p168 = por %p166, %p167
      %p169 = scmp.ne.s32.totalorder %s161, %s164
      %p170 = scmp.eq.s32.totalorder %s20, 0
      %p171 = por %p169, %p170
      %p172 = scmp.ne.s32.totalorder %s161, %s164
      %p173 = scmp.eq.s32.totalorder %s25, 1
      %p174 = por %p172, %p173
      %p175 = scmp.ne.s32.totalorder %s164, %s165
      %p176 = scmp.eq.s32.totalorder %s25, 0
      %p177 = por %p175, %p176
      %p178 = scmp.ne.s32.totalorder %s164, %s165
      %p179 = scmp.eq.s32.totalorder %s26, 1
      %p180 = por %p178, %p179
      %p182 = scmp.ne.s32.totalorder %s165, %s181
      %p183 = scmp.eq.s32.totalorder %s26, 0
      %p184 = por %p182, %p183
      %p185 = scmp.le.s32.totalorder 1, %s20
      %p186 = scmp.lt.s32.totalorder %s20, 3
      %p187 = pnand %p185, %p186
      %p188 = pneg %p187
      // Predicated region
      $region9: #{tpu_custom_call.1} parent=5 // pred_check
        _
      $region10: #{tpu_custom_call.1} parent=5 // pred_check_branch
        %190 = sbr.rel (%p187) target = $region12
      $region11: #{tpu_custom_call.1} parent=5 // pred_region
        %s191 = ssub.s32 %s20, 1
        // Predicated region
        $region13: #{tpu_custom_call.1} parent=11 // pred_check
          %p192 = pneg %p41
        $region14: #{tpu_custom_call.1} parent=11 // pred_check_branch
          %194 = sbr.rel (%p192) target = $region16
        $region15: #{tpu_custom_call.1} parent=11 // pred_region
          _
        $region16: #{tpu_custom_call.1} parent=11 // pred_fallthru
          _
        // Predicated region
        $region17: #{tpu_custom_call.1} parent=11 // pred_check
          %p195 = pneg %p88
        $region18: #{tpu_custom_call.1} parent=11 // pred_check_branch
          %197 = sbr.rel (%p195) target = $region20
        $region19: #{tpu_custom_call.1} parent=11 // pred_region
          %s199 = ssub.s32 512, 512
          %200 = vsyncadd [#allocation7], %s199
          %s201 = sshll.u32 [#allocation6], 4
          %s202 = int_to_ptr.vmem [resolvable:$true] %s201
          %207 = dma.hbm_to_vmem [thread:$0]  %s2, 512, %s202, [#allocation7], 128, 128, 8
        $region20: #{tpu_custom_call.1} parent=11 // pred_fallthru
          _
        // Predicated region
        $region21: #{tpu_custom_call.1} parent=11 // pred_check
          %p208 = pneg %p109
        $region22: #{tpu_custom_call.1} parent=11 // pred_check_branch
          %210 = sbr.rel (%p208) target = $region24
        $region23: #{tpu_custom_call.1} parent=11 // pred_region
          _
        $region24: #{tpu_custom_call.1} parent=11 // pred_fallthru
          _
        // Predicated region
        $region25: #{tpu_custom_call.1} parent=11 // pred_check
          %p211 = pneg %p130
        $region26: #{tpu_custom_call.1} parent=11 // pred_check_branch
          %213 = sbr.rel (%p211) target = $region28
        $region27: #{tpu_custom_call.1} parent=11 // pred_region
          %s215 = ssub.s32 1024, 1024
          %216 = vsyncadd [#allocation7], %s215
          %s217 = sshll.u32 [#allocation8], 4
          %s218 = int_to_ptr.vmem [resolvable:$true] %s217
          %223 = dma.hbm_to_vmem [thread:$0]  %s4, 1024, %s218, [#allocation7], 128, 128, 8
        $region28: #{tpu_custom_call.1} parent=11 // pred_fallthru
          _
        // Predicated region
        $region29: #{tpu_custom_call.1} parent=11 // pred_check
          %p224 = pneg %p151
        $region30: #{tpu_custom_call.1} parent=11 // pred_check_branch
          %226 = sbr.rel (%p224) target = $region32
        $region31: #{tpu_custom_call.1} parent=11 // pred_region
          _
        $region32: #{tpu_custom_call.1} parent=11 // pred_fallthru
          _
      $region12: #{tpu_custom_call.1} parent=5 // pred_fallthru
        _
      %p227 = scmp.lt.s32.totalorder %s20, 2
      // Predicated region
      $region33: #{tpu_custom_call.1} parent=5 // pred_check
        %p228 = pneg %p227
      $region34: #{tpu_custom_call.1} parent=5 // pred_check_branch
        %230 = sbr.rel (%p228) target = $region36
      $region35: #{tpu_custom_call.1} parent=5 // pred_region
        // Predicated region
        $region37: #{tpu_custom_call.1} parent=35 // pred_check
          %p231 = pneg %p61
        $region38: #{tpu_custom_call.1} parent=35 // pred_check_branch
          %233 = sbr.rel (%p231) target = $region40
        $region39: #{tpu_custom_call.1} parent=35 // pred_region
          %s234 = sand.u32 %s51, 1
          %s235 = scalar_lea.sflag [#allocation4], %s234
          %s236 = sand.u32 %s51, 1
          %s237 = smul.addr %s236, 8
          %s238 = scalar_lea.vmem [#allocation3], %s237
          %s240 = ssub.s32 128, 128
          %241 = vsyncadd %s235, %s240
          %s242 = smul.addr %s20, 128
          %s243 = scalar_lea.hbm %s1, %s242
          %s245 = sshll.u32 %s238, 4
          %s246 = int_to_ptr.vmem [resolvable:$true] %s245
          %248 = dma.hbm_to_vmem [thread:$0]  %s243, 128, %s246, %s235
        $region40: #{tpu_custom_call.1} parent=35 // pred_fallthru
          _
      $region36: #{tpu_custom_call.1} parent=5 // pred_fallthru
        _
      %p249 = scmp.le.s32.totalorder 1, %s20
      %p250 = scmp.lt.s32.totalorder %s20, 3
      %p251 = pnand %p249, %p250
      %p252 = pneg %p251
      // Predicated region
      $region41: #{tpu_custom_call.1} parent=5 // pred_check
        _
      $region42: #{tpu_custom_call.1} parent=5 // pred_check_branch
        %254 = sbr.rel (%p251) target = $region44
      $region43: #{tpu_custom_call.1} parent=5 // pred_region
        %s255 = ssub.s32 %s20, 1
        %s256 = sand.u32 %s54, 1
        %s257 = scalar_lea.sflag [#allocation4], %s256
        %s258 = sand.u32 %s54, 1
        %s259 = smul.addr %s258, 8
        %s260 = scalar_lea.vmem [#allocation3], %s259
        // Predicated region
        $region45: #{tpu_custom_call.1} parent=43 // pred_check
          %p261 = pneg %p67
        $region46: #{tpu_custom_call.1} parent=43 // pred_check_branch
          %263 = sbr.rel (%p261) target = $region48
        $region47: #{tpu_custom_call.1} parent=43 // pred_region
          %264 = dma.done %s257, 128
        $region48: #{tpu_custom_call.1} parent=43 // pred_fallthru
          _
        // Predicated region
        $region49: #{tpu_custom_call.1} parent=43 // pred_check
          %p265 = pneg %p88
        $region50: #{tpu_custom_call.1} parent=43 // pred_check_branch
          %267 = sbr.rel (%p265) target = $region52
        $region51: #{tpu_custom_call.1} parent=43 // pred_region
          %268 = dma.done [#allocation7], 512
        $region52: #{tpu_custom_call.1} parent=43 // pred_fallthru
          _
        // Predicated region
        $region53: #{tpu_custom_call.1} parent=43 // pred_check
          %p269 = pneg %p130
        $region54: #{tpu_custom_call.1} parent=43 // pred_check_branch
          %271 = sbr.rel (%p269) target = $region56
        $region55: #{tpu_custom_call.1} parent=43 // pred_region
          %272 = dma.done [#allocation7], 1024
        $region56: #{tpu_custom_call.1} parent=43 // pred_fallthru
          _
        %p273 = pneg %p41
        %p274 = pneg %p38
        %s275 = sand.u32 %s54, 1
        %s276 = scalar_lea.sflag [#allocation4], %s275
        %s277 = sand.u32 %s54, 1
        %s278 = smul.addr %s277, 8
        %s279 = scalar_lea.vmem [#allocation3], %s278
        %p280 = pneg %p67
        %p281 = pneg %p64
        %p282 = pneg %p88
        %p283 = pneg %p85
        %p284 = pneg %p109
        %p285 = pneg %p106
        %p286 = pneg %p130
        %p287 = pneg %p127
        %p288 = pneg %p151
        %p289 = pneg %p148
        %p290 = pneg %p177
        %p291 = pneg %p174
        %s292 = sand.u32 %s164, 1
        %s293 = scalar_lea.sflag [#allocation5], %s292
        %s294 = sand.u32 %s164, 1
        %s295 = smul.addr %s294, 8
        %s296 = scalar_lea.vmem [#allocation9], %s295
        %v297 = vld [vmem:[%s260] sm:$0xff]
        %v298 = vld [vmem:[#allocation6] sm:$0xff]
        %v299 = vld [vmem:[#allocation6 + $0x8] sm:$0xff]
        %v300 = vld [vmem:[#allocation6 + $0x10] sm:$0xff]
        %v301 = vld [vmem:[#allocation6 + $0x18] sm:$0xff]
        %v302 = vld [vmem:[%s3] sm:$0x1]
        %v304 = vlaneseq
        %v305 = vshrl.u32 %v304, 7
        %v306 = vsub.s32 0, %v305
        %v307 = vrot.slane %v302, %v306
        %vm309 = vcmask 261120
        %v311 = vsel %vm309, %v297, 0
        %313 = vmatprep.subr.mxu0 0.0
        %314 = vmatpush1.msra.mxu0 %v298
        %315 = vmatprep.subr.mxu0 0.0
        %316 = vmatpush1.msra.mxu0 %v299
        %317 = vmatprep.subr.mxu0 0.0
        %318 = vmatpush1.msra.mxu0 %v300
        %319 = vmatprep.subr.mxu0 0.0
        %320 = vmatpush1.msra.mxu0 %v301
        %321 = vmatprep.subr.mxu0 0.0
        %322 = vmatpush1.msra.mxu0 0.0
        %323 = vmatprep.subr.mxu0 0.0
        %324 = vmatpush1.msra.mxu0 0.0
        %325 = vmatprep.subr.mxu0 0.0
        %326 = vmatpush1.msra.mxu0 0.0
        %327 = vmatprep.subr.mxu0 0.0
        %328 = vmatpush1.msra.mxu0 0.0
        %329 = vmatprep.subr.mxu0 0.0
        %330 = vmatpush1.msra.mxu0 0.0
        %331 = vmatprep.subr.mxu0 0.0
        %332 = vmatpush1.msra.mxu0 0.0
        %333 = vmatprep.subr.mxu0 0.0
        %334 = vmatpush1.msra.mxu0 0.0
        %335 = vmatprep.subr.mxu0 0.0
        %336 = vmatpush1.msra.mxu0 0.0
        %337 = vmatprep.subr.mxu0 0.0
        %338 = vmatpush1.msra.mxu0 0.0
        %339 = vmatprep.subr.mxu0 0.0
        %340 = vmatpush1.msra.mxu0 0.0
        %341 = vmatprep.subr.mxu0 0.0
        %342 = vmatpush1.msra.mxu0 0.0
        %343 = vmatprep.subr.mxu0 0.0
        %344 = vmatpush1.msra.mxu0 0.0
        %345 = vmatprep.subr.mxu0 0.0
        %346 = vmatpush1.msra.mxu0 0.0
        %347 = vmatprep.subr.mxu0 0.0
        %348 = vmatpush1.msra.mxu0 0.0
        %349 = vmatprep.subr.mxu0 0.0
        %350 = vmatpush1.msra.mxu0 0.0
        %351 = vmatprep.subr.mxu0 0.0
        %352 = vmatpush1.msra.mxu0 0.0
        %353 = vmatprep.subr.mxu0 0.0
        %354 = vmatpush1.msra.mxu0 0.0
        %355 = vmatprep.subr.mxu0 0.0
        %356 = vmatpush1.msra.mxu0 0.0
        %357 = vmatprep.subr.mxu0 0.0
        %358 = vmatpush1.msra.mxu0 0.0
        %359 = vmatprep.subr.mxu0 0.0
        %360 = vmatpush1.msra.mxu0 0.0
        %361 = vmatprep.subr.mxu0 0.0
        %362 = vmatpush1.msra.mxu0 0.0
        %363 = vmatprep.subr.mxu0 0.0
        %364 = vmatpush1.msra.mxu0 0.0
        %365 = vmatprep.subr.mxu0 0.0
        %366 = vmatpush1.msra.mxu0 0.0
        %367 = vmatprep.subr.mxu0 0.0
        %368 = vmatpush1.msra.mxu0 0.0
        %369 = vmatprep.subr.mxu0 0.0
        %370 = vmatpush1.msra.mxu0 0.0
        %371 = vmatprep.subr.mxu0 0.0
        %372 = vmatpush1.msra.mxu0 0.0
        %373 = vmatprep.subr.mxu0 0.0
        %374 = vmatpush1.msra.mxu0 0.0
        %375 = vmatprep.subr.mxu0 0.0
        %376 = vmatpush1.msra.mxu0 0.0
        %377 = vmatprep.mubr.f32.mxu0 0.0
        %378 = vmatmul.mubr.f32.gmra.mrb[0].mxu0 %v311
        %v379 = vpop.f32.mrb[0].mxu0
        %v380 = vadd.f32 %v307, %v379
        %v381 = vpop.f32.mrb[0].mxu0
        %382 = vdwg.mxu0
        %s383 = sld [smem:[#allocation2]]
        %vm384 = vcmp.gt.f32.partialorder %v380, 0.0
        %v385 = vstv %s383
        %v386 = vmul.f32 %v385, %v380
        %v387 = vsel %vm384, %v380, %v386
        %v388 = vld [vmem:[#allocation8] sm:$0xff]
        %v389 = vld [vmem:[#allocation8 + $0x8] sm:$0xff]
        %v390 = vld [vmem:[#allocation8 + $0x10] sm:$0xff]
        %v391 = vld [vmem:[#allocation8 + $0x18] sm:$0xff]
        %v392 = vld [vmem:[#allocation8 + $0x20] sm:$0xff]
        %v393 = vld [vmem:[#allocation8 + $0x28] sm:$0xff]
        %v394 = vld [vmem:[#allocation8 + $0x30] sm:$0xff]
        %v395 = vld [vmem:[#allocation8 + $0x38] sm:$0xff]
        %v396 = vld [vmem:[%s5] sm:$0x1]
        %v398 = vlaneseq
        %v399 = vshrl.u32 %v398, 7
        %v400 = vsub.s32 0, %v399
        %v401 = vrot.slane %v396, %v400
        %vm403 = vcmask 523264
        %v405 = vsel %vm403, %v387, 0
        %407 = vmatprep.subr.mxu0 0.0
        %408 = vmatpush1.msra.mxu0 %v388
        %409 = vmatprep.subr.mxu0 0.0
        %410 = vmatpush1.msra.mxu0 %v389
        %411 = vmatprep.subr.mxu0 0.0
        %412 = vmatpush1.msra.mxu0 %v390
        %413 = vmatprep.subr.mxu0 0.0
        %414 = vmatpush1.msra.mxu0 %v391
        %415 = vmatprep.subr.mxu0 0.0
        %416 = vmatpush1.msra.mxu0 %v392
        %417 = vmatprep.subr.mxu0 0.0
        %418 = vmatpush1.msra.mxu0 %v393
        %419 = vmatprep.subr.mxu0 0.0
        %420 = vmatpush1.msra.mxu0 %v394
        %421 = vmatprep.subr.mxu0 0.0
        %422 = vmatpush1.msra.mxu0 %v395
        %423 = vmatprep.subr.mxu0 0.0
        %424 = vmatpush1.msra.mxu0 0.0
        %425 = vmatprep.subr.mxu0 0.0
        %426 = vmatpush1.msra.mxu0 0.0
        %427 = vmatprep.subr.mxu0 0.0
        %428 = vmatpush1.msra.mxu0 0.0
        %429 = vmatprep.subr.mxu0 0.0
        %430 = vmatpush1.msra.mxu0 0.0
        %431 = vmatprep.subr.mxu0 0.0
        %432 = vmatpush1.msra.mxu0 0.0
        %433 = vmatprep.subr.mxu0 0.0
        %434 = vmatpush1.msra.mxu0 0.0
        %435 = vmatprep.subr.mxu0 0.0
        %436 = vmatpush1.msra.mxu0 0.0
        %437 = vmatprep.subr.mxu0 0.0
        %438 = vmatpush1.msra.mxu0 0.0
        %439 = vmatprep.subr.mxu0 0.0
        %440 = vmatpush1.msra.mxu0 0.0
        %441 = vmatprep.subr.mxu0 0.0
        %442 = vmatpush1.msra.mxu0 0.0
        %443 = vmatprep.subr.mxu0 0.0
        %444 = vmatpush1.msra.mxu0 0.0
        %445 = vmatprep.subr.mxu0 0.0
        %446 = vmatpush1.msra.mxu0 0.0
        %447 = vmatprep.subr.mxu0 0.0
        %448 = vmatpush1.msra.mxu0 0.0
        %449 = vmatprep.subr.mxu0 0.0
        %450 = vmatpush1.msra.mxu0 0.0
        %451 = vmatprep.subr.mxu0 0.0
        %452 = vmatpush1.msra.mxu0 0.0
        %453 = vmatprep.subr.mxu0 0.0
        %454 = vmatpush1.msra.mxu0 0.0
        %455 = vmatprep.subr.mxu0 0.0
        %456 = vmatpush1.msra.mxu0 0.0
        %457 = vmatprep.subr.mxu0 0.0
        %458 = vmatpush1.msra.mxu0 0.0
        %459 = vmatprep.subr.mxu0 0.0
        %460 = vmatpush1.msra.mxu0 0.0
        %461 = vmatprep.subr.mxu0 0.0
        %462 = vmatpush1.msra.mxu0 0.0
        %463 = vmatprep.subr.mxu0 0.0
        %464 = vmatpush1.msra.mxu0 0.0
        %465 = vmatprep.subr.mxu0 0.0
        %466 = vmatpush1.msra.mxu0 0.0
        %467 = vmatprep.subr.mxu0 0.0
        %468 = vmatpush1.msra.mxu0 0.0
        %469 = vmatprep.subr.mxu0 0.0
        %470 = vmatpush1.msra.mxu0 0.0
        %471 = vmatprep.mubr.f32.mxu0 0.0
        %472 = vmatmul.mubr.f32.gmra.mrb[0].mxu0 %v405
        %v473 = vpop.f32.mrb[0].mxu0
        %v474 = vadd.f32 %v401, %v473
        %v475 = vpop.f32.mrb[0].mxu0
        %476 = vdwg.mxu0
        %477 = vst [vmem:[%s296] sm:$0xff] %v474
        %s478 = sand.u32 %s164, 1
        %s479 = scalar_lea.sflag [#allocation5], %s478
        %s480 = sand.u32 %s164, 1
        %s481 = smul.addr %s480, 8
        %s482 = scalar_lea.vmem [#allocation9], %s481
        // Predicated region
        $region57: #{tpu_custom_call.1} parent=43 // pred_check
          %p483 = pneg %p174
        $region58: #{tpu_custom_call.1} parent=43 // pred_check_branch
          %485 = sbr.rel (%p483) target = $region60
        $region59: #{tpu_custom_call.1} parent=43 // pred_region
          %s487 = ssub.s32 128, 128
          %488 = vsyncadd %s479, %s487
          %s489 = smul.addr %s25, 128
          %s490 = scalar_lea.hbm %s6, %s489
          %s492 = sshll.u32 %s482, 4
          %s493 = int_to_ptr.vmem [resolvable:$true] %s492
          %495 = dma.vmem_to_hbm [thread:$0]  %s493, 128, %s490, %s479
        $region60: #{tpu_custom_call.1} parent=43 // pred_fallthru
          _
      $region44: #{tpu_custom_call.1} parent=5 // pred_fallthru
        _
      %p496 = scmp.le.s32.totalorder 2, %s20
      // Predicated region
      $region61: #{tpu_custom_call.1} parent=5 // pred_check
        %p497 = pneg %p496
      $region62: #{tpu_custom_call.1} parent=5 // pred_check_branch
        %499 = sbr.rel (%p497) target = $region64
      $region63: #{tpu_custom_call.1} parent=5 // pred_region
        %s500 = ssub.s32 %s20, 2
        // Predicated region
        $region65: #{tpu_custom_call.1} parent=63 // pred_check
          %p501 = pneg %p180
        $region66: #{tpu_custom_call.1} parent=63 // pred_check_branch
          %503 = sbr.rel (%p501) target = $region68
        $region67: #{tpu_custom_call.1} parent=63 // pred_region
          %s504 = sand.u32 %s165, 1
          %s505 = scalar_lea.sflag [#allocation5], %s504
          %s506 = sand.u32 %s165, 1
          %s507 = smul.addr %s506, 8
          %s508 = scalar_lea.vmem [#allocation9], %s507
          %509 = dma.done %s505, 128
        $region68: #{tpu_custom_call.1} parent=63 // pred_fallthru
          _
      $region64: #{tpu_custom_call.1} parent=5 // pred_fallthru
        _
    $region6: #{tpu_custom_call.1} parent=1 // loop_footer
      %s24 = sadd.s32 1, %s20
    $region7: #{tpu_custom_call.1} parent=1 // loop_footer_branch
      %19 = sbr.rel target = $region3
    $region8: #{tpu_custom_call.1} parent=1 // loop_exit
      _
    %510 = vsyncpa [#allocation4], 1
    %s511 = scalar_lea.sflag [#allocation4], 1
    %512 = vsyncpa %s511, 1
    %513 = vsyncpa [#allocation7], 1
    %514 = vsyncpa [#allocation5], 1
    %s515 = scalar_lea.sflag [#allocation5], 1
    %516 = vsyncpa %s515, 1

</llo_original>
